<compile_context>
chip_gen: v7x
topology: tpu7x:2x2x1
jax: 0.10.0
libtpu: 0.0.40
codegen_flags: <defaults>
</compile_context>

<pallas_src>
import functools
import math

import jax
import jax.numpy as jnp
from jax import lax
from jax.experimental import pallas as pl
from jax.experimental.pallas import tpu as pltpu

EPS = 1e-12  # matches torch F.normalize default eps


def _hipp_kernel(embd_ref,
                 w1h_ref, b1h_ref, w2h_ref, b2h_ref,
                 w1p_ref, b1p_ref, w2p_ref, b2p_ref,
                 loss_ref, *, embd_dim, hipp_out_dim, compute_dtype):
    """get_hipp_loss for the view selected by the grid index.

    embd_ref : (1, B, D) VMEM block for this view.
    loss_ref : (1, 8, 128) output tile (scalar loss broadcast into it so the
               store stays a full, unmasked tile).
    """
    e = embd_ref[0].astype(jnp.float32)            # (B, D)
    B = e.shape[0]

    def mm(a, w):
        # MXU matmul; operands in compute_dtype (bf16 on v6e/v7x fast path),
        # accumulation always in f32.
        return jnp.dot(a.astype(compute_dtype), w.astype(compute_dtype),
                       preferred_element_type=jnp.float32)

    e_prev = e[:B - 1]                             # embd[:-1]
    e_next = e[1:]                                 # embd[1:]

    # hipp_mlp layer 1 on concat([embd[:-1], embd[1:]], axis=1), expressed as
    # a split matmul against the two row-blocks of W1h (static ref slices,
    # free views; embd_dim=128 keeps them sublane-aligned).
    h1 = jnp.maximum(
        mm(e_prev, w1h_ref[:embd_dim, :]) + mm(e_next, w1h_ref[embd_dim:, :])
        + b1h_ref[...], 0.0)
    hr = mm(h1, w2h_ref[...]) + b2h_ref[...]

    # F.normalize(hipp_resp, dim=1): x / max(||x||, eps) == x * rsqrt(max(ss, eps^2))
    hr_n = hr * lax.rsqrt(
        jnp.maximum(jnp.sum(hr * hr, axis=1, keepdims=True), EPS * EPS))

    # pred_mlp on concat([hipp_resp, embd[1:]], axis=1) as a split matmul.
    p1 = jnp.maximum(
        mm(hr_n, w1p_ref[:hipp_out_dim, :]) + mm(e_next, w1p_ref[hipp_out_dim:, :])
        + b1p_ref[...], 0.0)
    po = mm(p1, w2p_ref[...]) + b2p_ref[...]

    po_n = po * lax.rsqrt(
        jnp.maximum(jnp.sum(po * po, axis=1, keepdims=True), EPS * EPS))

    # pred_loss = 2 - 2 * sum(pred_output[:-1] * embd[2:]) / (B - 2)
    # (B is static; B <= 2 would divide by zero, same as the torch module.)
    dot_sum = jnp.sum(po_n[:B - 2] * e[2:])
    loss = 2.0 - 2.0 * dot_sum / (B - 2)
    loss_ref[...] = jnp.broadcast_to(loss, loss_ref.shape).astype(jnp.float32)


def hipp_head_forward(input_embd, params, two_views=True,
                      compute_dtype=jnp.float32):
    """Mirrors HippHead.forward. input_embd: (N, D) float32."""
    D = input_embd.shape[1]
    if two_views:
        # (N, D) -> (B, 2, D) -> (2, B, D): each view becomes a contiguous slab.
        views = input_embd.reshape(-1, 2, D).transpose(1, 0, 2)
    else:
        views = input_embd[None]
    V, B, _ = views.shape

    w1h, b1h = params["w1h"], params["b1h"]
    w2h, b2h = params["w2h"], params["b2h"]
    w1p, b1p = params["w1p"], params["b1p"]
    w2p, b2p = params["w2p"], params["b2p"]
    hipp_hidden, hipp_out = w1h.shape[1], w2h.shape[1]
    pred_hidden = w1p.shape[1]

    kernel = functools.partial(
        _hipp_kernel, embd_dim=D, hipp_out_dim=hipp_out,
        compute_dtype=compute_dtype)

    # Weights/biases: full-array blocks with a constant index_map -> resident
    # in VMEM across the (parallel) view axis, DMA'd once.
    def resident(shape):
        return pl.BlockSpec(shape, lambda v: (0,) * len(shape))

    in_specs = [
        pl.BlockSpec((1, B, D), lambda v: (v, 0, 0)),   # per-view embedding
        resident(w1h.shape), resident(b1h.shape),
        resident(w2h.shape), resident(b2h.shape),
        resident(w1p.shape), resident(b1p.shape),
        resident(w2p.shape), resident(b2p.shape),
    ]
    out_specs = pl.BlockSpec((1, 8, 128), lambda v: (v, 0, 0))

    # Scheduling hints: matmul FLOPs / bytes and a VMEM budget sized from the
    # real footprint (capped at 64 MiB, the v7x per-TC budget).
    rows = B - 1
    flops_per_view = 2 * rows * (2 * D * hipp_hidden
                                 + hipp_hidden * hipp_out
                                 + (hipp_out + D) * pred_hidden
                                 + pred_hidden * D)
    in_bytes = sum(int(x.size) * x.dtype.itemsize
                   for x in (views, w1h, b1h, w2h, b2h, w1p, b1p, w2p, b2p))
    out_bytes = V * 8 * 128 * 4
    vmem_limit = int(min(64 * 1024 * 1024,
                         max(16 * 1024 * 1024, 8 * in_bytes)))

    loss_tiles = pl.pallas_call(
        kernel,
        out_shape=jax.ShapeDtypeStruct((V, 8, 128), jnp.float32),
        grid_spec=pltpu.PrefetchScalarGridSpec(
            num_scalar_prefetch=0,
            grid=(V,),
            in_specs=in_specs,
            out_specs=out_specs),
        compiler_params=pltpu.CompilerParams(
            dimension_semantics=("parallel",),
            vmem_limit_bytes=vmem_limit),
        cost_estimate=pl.CostEstimate(
            flops=int(V * flops_per_view),
            transcendentals=int(V * 2 * rows),
            bytes_accessed=int(in_bytes + out_bytes)),
    )(views, w1h, b1h, w2h, b2h, w1p, b1p, w2p, b2p)

    total = jnp.sum(loss_tiles[:, 0, 0])
    return {"loss": total, "pred_loss": total}


# ---------------- pure-JAX reference (for correctness check) ----------------
def _mlp_ref(x, w1, b1, w2, b2):
    return jnp.maximum(x @ w1 + b1, 0.0) @ w2 + b2


def _normalize_ref(x):
    return x / jnp.maximum(jnp.sqrt(jnp.sum(x * x, axis=1, keepdims=True)), EPS)


def _hipp_loss_ref(embd, p):
    tt = jnp.concatenate([embd[:-1], embd[1:]], axis=1)
    hr = _normalize_ref(_mlp_ref(tt, p["w1h"], p["b1h"], p["w2h"], p["b2h"]))
    pred_in = jnp.concatenate([hr, embd[1:]], axis=1)
    po = _mlp_ref(pred_in, p["w1p"], p["b1p"], p["w2p"], p["b2p"])[:-1]
    po = _normalize_ref(po)
    return 2.0 - 2.0 * jnp.sum(po * embd[2:]) / po.shape[0]


def _forward_ref(input_embd, p):
    x = input_embd.reshape(-1, 2, input_embd.shape[1])
    return _hipp_loss_ref(x[:, 0, :], p) + _hipp_loss_ref(x[:, 1, :], p)


# ---------------------------- parameter init --------------------------------
def _kaiming(key, fan_in, fan_out):
    return (jax.random.normal(key, (fan_in, fan_out), jnp.float32)
            * math.sqrt(2.0 / fan_in))


def make_params(key, embd_dim, hipp_hidden, hipp_out, pred_hidden):
    k = jax.random.split(key, 4)
    return {
        # hipp_mlp: (2*D) -> hipp_hidden -> hipp_out
        "w1h": _kaiming(k[0], 2 * embd_dim, hipp_hidden),
        "b1h": jnp.zeros((1, hipp_hidden), jnp.float32),
        "w2h": _kaiming(k[1], hipp_hidden, hipp_out),
        "b2h": jnp.zeros((1, hipp_out), jnp.float32),
        # pred_mlp: (hipp_out + D) -> pred_hidden -> D
        "w1p": _kaiming(k[2], hipp_out + embd_dim, pred_hidden),
        "b1p": jnp.zeros((1, pred_hidden), jnp.float32),
        "w2p": _kaiming(k[3], pred_hidden, embd_dim),
        "b2p": jnp.zeros((1, embd_dim), jnp.float32),
    }


if __name__ == "__main__":
    key = jax.random.PRNGKey(0)
    k_x, k_p = jax.random.split(key)

    # 16 samples => 8 rows per view after reshape(-1, 2, D).
    # All feature dims are 128-multiples so the kernel is lane-dense.
    N, D = 16, 128
    params = make_params(k_p, embd_dim=D, hipp_hidden=128,
                         hipp_out=128, pred_hidden=128)
    input_embd = jax.random.normal(k_x, (N, D), jnp.float32)

    # f32 MXU path: tight check against the pure-JAX reference.
    out = hipp_head_forward(input_embd, params, two_views=True)
    loss = jax.block_until_ready(out["loss"])
    ref = _forward_ref(input_embd, params)
    assert jnp.allclose(loss, ref, atol=1e-3, rtol=1e-3), (loss, ref)

    # bf16-operand MXU path (v6e/v7x fast path): f32 accumulation + epilogue.
    out_bf16 = hipp_head_forward(input_embd, params, two_views=True,
                                 compute_dtype=jnp.bfloat16)
    loss_bf16 = jax.block_until_ready(out_bf16["loss"])
    assert bool(jnp.isfinite(loss_bf16))
    assert jnp.allclose(loss_bf16, ref, atol=0.1, rtol=0.1), (loss_bf16, ref)

    print("KERNEL_OK")
</pallas_src>

<mosaic_0001>
module attributes {stable_mosaic.version = 11 : i64} {
  func.func @_hipp_kernel(%arg0: i32, %arg1: memref<1x8x128xf32, #tpu.memory_space<vmem>>, %arg2: memref<256x128xf32, #tpu.memory_space<vmem>>, %arg3: memref<1x128xf32, #tpu.memory_space<vmem>>, %arg4: memref<128x128xf32, #tpu.memory_space<vmem>>, %arg5: memref<1x128xf32, #tpu.memory_space<vmem>>, %arg6: memref<256x128xf32, #tpu.memory_space<vmem>>, %arg7: memref<1x128xf32, #tpu.memory_space<vmem>>, %arg8: memref<128x128xf32, #tpu.memory_space<vmem>>, %arg9: memref<1x128xf32, #tpu.memory_space<vmem>>, %arg10: memref<1x8x128xf32, #tpu.memory_space<vmem>>) attributes {dimension_semantics = [#tpu.dimension_semantics<parallel>], iteration_bounds = array<i64: 2>, scalar_prefetch = 0 : i64, scratch_operands = 0 : i64, tpu.core_type = #tpu.core_type<tc>, window_params = [{transform_indices = @transform_0, window_bounds = array<i64: 1, 8, 128>}, {pipeline_mode = #tpu.pipeline_mode<synchronous>, transform_indices = @transform_1, window_bounds = array<i64: 256, 128>}, {pipeline_mode = #tpu.pipeline_mode<synchronous>, transform_indices = @transform_2, window_bounds = array<i64: 1, 128>}, {pipeline_mode = #tpu.pipeline_mode<synchronous>, transform_indices = @transform_3, window_bounds = array<i64: 128, 128>}, {pipeline_mode = #tpu.pipeline_mode<synchronous>, transform_indices = @transform_4, window_bounds = array<i64: 1, 128>}, {pipeline_mode = #tpu.pipeline_mode<synchronous>, transform_indices = @transform_5, window_bounds = array<i64: 256, 128>}, {pipeline_mode = #tpu.pipeline_mode<synchronous>, transform_indices = @transform_6, window_bounds = array<i64: 1, 128>}, {pipeline_mode = #tpu.pipeline_mode<synchronous>, transform_indices = @transform_7, window_bounds = array<i64: 128, 128>}, {pipeline_mode = #tpu.pipeline_mode<synchronous>, transform_indices = @transform_8, window_bounds = array<i64: 1, 128>}, {transform_indices = @transform_9, window_bounds = array<i64: 1, 8, 128>}]} {
    %c0 = arith.constant 0 : index
    %c0_0 = arith.constant 0 : index
    %c0_1 = arith.constant 0 : index
    %0 = vector.load %arg1[%c0, %c0_0, %c0_1] : memref<1x8x128xf32, #tpu.memory_space<vmem>>, vector<1x8x128xf32>
    %1 = vector.shape_cast %0 : vector<1x8x128xf32> to vector<8x128xf32>
    %2 = vector.extract_strided_slice %1 {offsets = [0, 0], sizes = [7, 128], strides = [1, 1]} : vector<8x128xf32> to vector<7x128xf32>
    %3 = vector.extract_strided_slice %1 {offsets = [1, 0], sizes = [7, 128], strides = [1, 1]} : vector<8x128xf32> to vector<7x128xf32>
    %c0_2 = arith.constant 0 : index
    %c0_3 = arith.constant 0 : index
    %4 = vector.load %arg2[%c0_2, %c0_3] : memref<256x128xf32, #tpu.memory_space<vmem>>, vector<128x128xf32>
    %cst = arith.constant dense<0.000000e+00> : vector<7x128xf32>
    %5 = tpu.matmul %2, %4, %cst {dimension_numbers = #tpu.dot_dimension_numbers<[1], [0], [0], [1], [0, 0, 1, 1], [], []>} : vector<7x128xf32>, vector<128x128xf32>, vector<7x128xf32> -> vector<7x128xf32>
    %c128 = arith.constant 128 : index
    %c0_4 = arith.constant 0 : index
    %6 = vector.load %arg2[%c128, %c0_4] : memref<256x128xf32, #tpu.memory_space<vmem>>, vector<128x128xf32>
    %cst_5 = arith.constant dense<0.000000e+00> : vector<7x128xf32>
    %7 = tpu.matmul %3, %6, %cst_5 {dimension_numbers = #tpu.dot_dimension_numbers<[1], [0], [0], [1], [0, 0, 1, 1], [], []>} : vector<7x128xf32>, vector<128x128xf32>, vector<7x128xf32> -> vector<7x128xf32>
    %8 = arith.addf %5, %7 : vector<7x128xf32>
    %c0_6 = arith.constant 0 : index
    %c0_7 = arith.constant 0 : index
    %9 = vector.load %arg3[%c0_6, %c0_7] : memref<1x128xf32, #tpu.memory_space<vmem>>, vector<1x128xf32>
    %10 = vector.broadcast %9 : vector<1x128xf32> to vector<7x128xf32>
    %11 = arith.addf %8, %10 : vector<7x128xf32>
    %cst_8 = arith.constant 0.000000e+00 : f32
    %12 = vector.broadcast %cst_8 : f32 to vector<7x128xf32>
    %13 = arith.maximumf %11, %12 : vector<7x128xf32>
    %c0_9 = arith.constant 0 : index
    %c0_10 = arith.constant 0 : index
    %14 = vector.load %arg4[%c0_9, %c0_10] : memref<128x128xf32, #tpu.memory_space<vmem>>, vector<128x128xf32>
    %cst_11 = arith.constant dense<0.000000e+00> : vector<7x128xf32>
    %15 = tpu.matmul %13, %14, %cst_11 {dimension_numbers = #tpu.dot_dimension_numbers<[1], [0], [0], [1], [0, 0, 1, 1], [], []>} : vector<7x128xf32>, vector<128x128xf32>, vector<7x128xf32> -> vector<7x128xf32>
    %c0_12 = arith.constant 0 : index
    %c0_13 = arith.constant 0 : index
    %16 = vector.load %arg5[%c0_12, %c0_13] : memref<1x128xf32, #tpu.memory_space<vmem>>, vector<1x128xf32>
    %17 = vector.broadcast %16 : vector<1x128xf32> to vector<7x128xf32>
    %18 = arith.addf %15, %17 : vector<7x128xf32>
    %19 = arith.mulf %18, %18 : vector<7x128xf32>
    %cst_14 = arith.constant dense<0.000000e+00> : vector<7xf32>
    %20 = vector.multi_reduction <add>, %19, %cst_14 [1] : vector<7x128xf32> to vector<7xf32>
    %21 = vector.shape_cast %20 : vector<7xf32> to vector<7x1xf32>
    %cst_15 = arith.constant 1.000000e-24 : f32
    %22 = vector.broadcast %cst_15 : f32 to vector<7x1xf32>
    %23 = arith.maximumf %21, %22 : vector<7x1xf32>
    %24 = math.rsqrt %23 : vector<7x1xf32>
    %25 = vector.broadcast %24 : vector<7x1xf32> to vector<7x128xf32>
    %26 = arith.mulf %18, %25 : vector<7x128xf32>
    %c0_16 = arith.constant 0 : index
    %c0_17 = arith.constant 0 : index
    %27 = vector.load %arg6[%c0_16, %c0_17] : memref<256x128xf32, #tpu.memory_space<vmem>>, vector<128x128xf32>
    %cst_18 = arith.constant dense<0.000000e+00> : vector<7x128xf32>
    %28 = tpu.matmul %26, %27, %cst_18 {dimension_numbers = #tpu.dot_dimension_numbers<[1], [0], [0], [1], [0, 0, 1, 1], [], []>} : vector<7x128xf32>, vector<128x128xf32>, vector<7x128xf32> -> vector<7x128xf32>
    %c128_19 = arith.constant 128 : index
    %c0_20 = arith.constant 0 : index
    %29 = vector.load %arg6[%c128_19, %c0_20] : memref<256x128xf32, #tpu.memory_space<vmem>>, vector<128x128xf32>
    %cst_21 = arith.constant dense<0.000000e+00> : vector<7x128xf32>
    %30 = tpu.matmul %3, %29, %cst_21 {dimension_numbers = #tpu.dot_dimension_numbers<[1], [0], [0], [1], [0, 0, 1, 1], [], []>} : vector<7x128xf32>, vector<128x128xf32>, vector<7x128xf32> -> vector<7x128xf32>
    %31 = arith.addf %28, %30 : vector<7x128xf32>
    %c0_22 = arith.constant 0 : index
    %c0_23 = arith.constant 0 : index
    %32 = vector.load %arg7[%c0_22, %c0_23] : memref<1x128xf32, #tpu.memory_space<vmem>>, vector<1x128xf32>
    %33 = vector.broadcast %32 : vector<1x128xf32> to vector<7x128xf32>
    %34 = arith.addf %31, %33 : vector<7x128xf32>
    %cst_24 = arith.constant 0.000000e+00 : f32
    %35 = vector.broadcast %cst_24 : f32 to vector<7x128xf32>
    %36 = arith.maximumf %34, %35 : vector<7x128xf32>
    %c0_25 = arith.constant 0 : index
    %c0_26 = arith.constant 0 : index
    %37 = vector.load %arg8[%c0_25, %c0_26] : memref<128x128xf32, #tpu.memory_space<vmem>>, vector<128x128xf32>
    %cst_27 = arith.constant dense<0.000000e+00> : vector<7x128xf32>
    %38 = tpu.matmul %36, %37, %cst_27 {dimension_numbers = #tpu.dot_dimension_numbers<[1], [0], [0], [1], [0, 0, 1, 1], [], []>} : vector<7x128xf32>, vector<128x128xf32>, vector<7x128xf32> -> vector<7x128xf32>
    %c0_28 = arith.constant 0 : index
    %c0_29 = arith.constant 0 : index
    %39 = vector.load %arg9[%c0_28, %c0_29] : memref<1x128xf32, #tpu.memory_space<vmem>>, vector<1x128xf32>
    %40 = vector.broadcast %39 : vector<1x128xf32> to vector<7x128xf32>
    %41 = arith.addf %38, %40 : vector<7x128xf32>
    %42 = arith.mulf %41, %41 : vector<7x128xf32>
    %cst_30 = arith.constant dense<0.000000e+00> : vector<7xf32>
    %43 = vector.multi_reduction <add>, %42, %cst_30 [1] : vector<7x128xf32> to vector<7xf32>
    %44 = vector.shape_cast %43 : vector<7xf32> to vector<7x1xf32>
    %cst_31 = arith.constant 1.000000e-24 : f32
    %45 = vector.broadcast %cst_31 : f32 to vector<7x1xf32>
    %46 = arith.maximumf %44, %45 : vector<7x1xf32>
    %47 = math.rsqrt %46 : vector<7x1xf32>
    %48 = vector.broadcast %47 : vector<7x1xf32> to vector<7x128xf32>
    %49 = arith.mulf %41, %48 : vector<7x128xf32>
    %50 = vector.extract_strided_slice %49 {offsets = [0, 0], sizes = [6, 128], strides = [1, 1]} : vector<7x128xf32> to vector<6x128xf32>
    %51 = vector.extract_strided_slice %1 {offsets = [2, 0], sizes = [6, 128], strides = [1, 1]} : vector<8x128xf32> to vector<6x128xf32>
    %52 = arith.mulf %50, %51 : vector<6x128xf32>
    %53 = vector.shape_cast %52 : vector<6x128xf32> to vector<1x6x128xf32>
    %cst_32 = arith.constant dense<0.000000e+00> : vector<1xf32>
    %54 = vector.multi_reduction <add>, %53, %cst_32 [1, 2] : vector<1x6x128xf32> to vector<1xf32>
    %55 = vector.shape_cast %54 : vector<1xf32> to vector<1x1x1xf32>
    %56 = vector.extract %55[0, 0, 0] : f32 from vector<1x1x1xf32>
    %cst_33 = arith.constant 2.000000e+00 : f32
    %57 = arith.mulf %cst_33, %56 : f32
    %cst_34 = arith.constant 6.000000e+00 : f32
    %58 = arith.divf %57, %cst_34 : f32
    %cst_35 = arith.constant 2.000000e+00 : f32
    %59 = arith.subf %cst_35, %58 : f32
    %60 = vector.broadcast %59 : f32 to vector<1x8x128xf32>
    %c0_36 = arith.constant 0 : index
    %c0_37 = arith.constant 0 : index
    %c0_38 = arith.constant 0 : index
    %61 = vector.load %arg10[%c0_36, %c0_37, %c0_38] : memref<1x8x128xf32, #tpu.memory_space<vmem>>, vector<1x8x128xf32>
    tpu.vector_store %arg10[%c0_36, %c0_37, %c0_38], %60 {strides = array<i32>} : memref<1x8x128xf32, #tpu.memory_space<vmem>>, vector<1x8x128xf32>,
    return
  }
  func.func @transform_0(%arg0: i32) -> (i32, i32, i32) {
    %c0_i32 = arith.constant 0 : i32
    %c0_i32_0 = arith.constant 0 : i32
    %c0_i32_1 = arith.constant 0 : i32
    return %arg0, %c0_i32, %c0_i32_0 : i32, i32, i32
  }
  func.func @transform_1(%arg0: i32) -> (i32, i32) {
    %c0_i32 = arith.constant 0 : i32
    %c0_i32_0 = arith.constant 0 : i32
    %c0_i32_1 = arith.constant 0 : i32
    return %c0_i32, %c0_i32_0 : i32, i32
  }
  func.func @transform_2(%arg0: i32) -> (i32, i32) {
    %c0_i32 = arith.constant 0 : i32
    %c0_i32_0 = arith.constant 0 : i32
    %c0_i32_1 = arith.constant 0 : i32
    return %c0_i32, %c0_i32_0 : i32, i32
  }
  func.func @transform_3(%arg0: i32) -> (i32, i32) {
    %c0_i32 = arith.constant 0 : i32
    %c0_i32_0 = arith.constant 0 : i32
    %c0_i32_1 = arith.constant 0 : i32
    return %c0_i32, %c0_i32_0 : i32, i32
  }
  func.func @transform_4(%arg0: i32) -> (i32, i32) {
    %c0_i32 = arith.constant 0 : i32
    %c0_i32_0 = arith.constant 0 : i32
    %c0_i32_1 = arith.constant 0 : i32
    return %c0_i32, %c0_i32_0 : i32, i32
  }
  func.func @transform_5(%arg0: i32) -> (i32, i32) {
    %c0_i32 = arith.constant 0 : i32
    %c0_i32_0 = arith.constant 0 : i32
    %c0_i32_1 = arith.constant 0 : i32
    return %c0_i32, %c0_i32_0 : i32, i32
  }
  func.func @transform_6(%arg0: i32) -> (i32, i32) {
    %c0_i32 = arith.constant 0 : i32
    %c0_i32_0 = arith.constant 0 : i32
    %c0_i32_1 = arith.constant 0 : i32
    return %c0_i32, %c0_i32_0 : i32, i32
  }
  func.func @transform_7(%arg0: i32) -> (i32, i32) {
    %c0_i32 = arith.constant 0 : i32
    %c0_i32_0 = arith.constant 0 : i32
    %c0_i32_1 = arith.constant 0 : i32
    return %c0_i32, %c0_i32_0 : i32, i32
  }
  func.func @transform_8(%arg0: i32) -> (i32, i32) {
    %c0_i32 = arith.constant 0 : i32
    %c0_i32_0 = arith.constant 0 : i32
    %c0_i32_1 = arith.constant 0 : i32
    return %c0_i32, %c0_i32_0 : i32, i32
  }
  func.func @transform_9(%arg0: i32) -> (i32, i32, i32) {
    %c0_i32 = arith.constant 0 : i32
    %c0_i32_0 = arith.constant 0 : i32
    %c0_i32_1 = arith.constant 0 : i32
    return %arg0, %c0_i32, %c0_i32_0 : i32, i32, i32
  }
}

</mosaic_0001>

<llo_original>
// kernel: tpu_custom_call.1
$region0: #{tpu_custom_call.1}
  #allocation0 [shape = 'u32[]', space=smem, size = 0x4, offset = 0x4, fixed_abs, tag = 'smem constant byte address 0x4 - core index']
  #allocation1 [shape = 'u32[144,128]{1,0:T(1,128)}', space=vmem, size = 0x12000, scoped, tag = 'internal scratch']
  %s0 = inlined_call_operand.hbm [shape: f32[2,8,128], index: 0, kind: input, shape index: {}]
  %s1 = inlined_call_operand.hbm [shape: f32[256,128], index: 1, kind: input, shape index: {}]
  %s2 = inlined_call_operand.vmem [shape: f32[1,128], index: 2, kind: input, shape index: {}]
  %s3 = inlined_call_operand.hbm [shape: f32[128,128], index: 3, kind: input, shape index: {}]
  %s4 = inlined_call_operand.vmem [shape: f32[1,128], index: 4, kind: input, shape index: {}]
  %s5 = inlined_call_operand.hbm [shape: f32[256,128], index: 5, kind: input, shape index: {}]
  %s6 = inlined_call_operand.vmem [shape: f32[1,128], index: 6, kind: input, shape index: {}]
  %s7 = inlined_call_operand.hbm [shape: f32[128,128], index: 7, kind: input, shape index: {}]
  %s8 = inlined_call_operand.vmem [shape: f32[1,128], index: 8, kind: input, shape index: {}]
  %s9 = inlined_call_operand.hbm [shape: f32[2,8,128], index: 9, kind: output, shape index: {}]
  %s10 = sld [smem:[#allocation0]]
  $region89: #{tpu_custom_call.1} parent=0
    _
  %s12 = ssub.s32 1, %s10
  %s13 = scalar_select 0, %s12, %s10
  $region1: #{tpu_custom_call.1} parent=0
    #allocation2 [shape = 'u8[8192]{0}', space=vmem, size = 0x2000, scoped, tag = 'input window, operand 0']
    #allocation3 [shape = 's32[2]{0}', space=sflag, size = 0x8, scoped, tag = 'scoped memory for tpu_custom_call.1']
    #allocation4 [shape = 's32[2]{0}', space=sflag, size = 0x8, scoped, tag = 'scoped memory for tpu_custom_call.1']
    #allocation5 [shape = 'u8[131072]{0}', space=vmem, size = 0x20000, scoped, tag = 'input window, operand 1, single buffered']
    #allocation6 [shape = 's32[1]{0}', space=sflag, size = 0x4, scoped, tag = 'scoped memory for tpu_custom_call.1']
    #allocation7 [shape = 'u8[65536]{0}', space=vmem, size = 0x10000, scoped, tag = 'input window, operand 3, single buffered']
    #allocation8 [shape = 'u8[131072]{0}', space=vmem, size = 0x20000, scoped, tag = 'input window, operand 5, single buffered']
    #allocation9 [shape = 's32[1]{0}', space=sflag, size = 0x4, scoped, tag = 'scoped memory for tpu_custom_call.1']
    #allocation10 [shape = 'u8[65536]{0}', space=vmem, size = 0x10000, scoped, tag = 'input window, operand 7, single buffered']
    #allocation11 [shape = 'u8[8192]{0}', space=vmem, size = 0x2000, scoped, tag = 'output window, operand 0']
    %14 = vsyncpa [#allocation3], 0
    %s15 = scalar_lea.sflag [#allocation3], 1
    %16 = vsyncpa %s15, 0
    %17 = vsyncpa [#allocation6], 0
    %18 = vsyncpa [#allocation9], 0
    %19 = vsyncpa [#allocation4], 0
    %s20 = scalar_lea.sflag [#allocation4], 1
    %21 = vsyncpa %s20, 0
    loop: start=0, step=1, limit=4
    $region2: #{tpu_custom_call.1} parent=1 // loop_pre_header
      _
    $region3: #{tpu_custom_call.1} parent=1 // loop_header
      %s23 = sphi 0, %s27
      %p24 = scmp.ge.s32.totalorder %s23, 4
      %s33 = sphi 0, %s35
      %s36 = sphi 0, %s33
      %s37 = sphi 0, %s36
      %s53 = sphi 0, %s37
      %s57 = sphi 0, %s57
      %s59 = sphi 0, %s57
      %s60 = sphi 0, %s59
      %s74 = sphi 0, %s60
      %s78 = sphi 0, %s78
      %s80 = sphi 0, %s78
      %s81 = sphi 0, %s80
      %s95 = sphi 0, %s81
      %s99 = sphi 0, %s99
      %s101 = sphi 0, %s99
      %s102 = sphi 0, %s101
      %s116 = sphi 0, %s102
      %s120 = sphi 0, %s120
      %s122 = sphi 0, %s120
      %s123 = sphi 0, %s122
      %s137 = sphi 0, %s123
      %s141 = sphi 0, %s141
      %s143 = sphi 0, %s141
      %s144 = sphi 0, %s143
      %s158 = sphi 0, %s144
      %s162 = sphi 0, %s162
      %s164 = sphi 0, %s162
      %s165 = sphi 0, %s164
      %s179 = sphi 0, %s165
      %s183 = sphi 0, %s183
      %s185 = sphi 0, %s183
      %s186 = sphi 0, %s185
      %s200 = sphi 0, %s186
      %s204 = sphi 0, %s204
      %s206 = sphi 0, %s204
      %s207 = sphi 0, %s206
      %s221 = sphi 0, %s207
      %s227 = sphi 0, %s229
      %s230 = sphi 0, %s227
      %s231 = sphi 0, %s230
      %s247 = sphi 0, %s231
    $region4: #{tpu_custom_call.1} parent=1 // loop_header_branch
      %26 = sbr.rel (%p24) target = $region8
    $region5: #{tpu_custom_call.1} parent=1 // loop_body
      %s28 = ssub.s32 %s23, 1
      %s29 = ssub.s32 %s23, 2
      %s30 = sadd.s32 %s23, 1
      %s31 = ssub.s32 %s23, %s30
      %p32 = scmp.eq.s32.totalorder %s31, 0
      %s34 = sadd.s32 %s33, 1
      %s35 = scalar_select %p32, %s33, %s34
      %p38 = pneg %p32
      %p39 = scmp.eq.s32.totalorder %s23, 1
      %p40 = por %p38, %p39
      %p41 = scmp.ne.s32.totalorder %s33, %s36
      %p42 = scmp.eq.s32.totalorder %s23, 0
      %p43 = por %p41, %p42
      %p44 = scmp.ne.s32.totalorder %s33, %s36
      %p45 = scmp.eq.s32.totalorder %s28, 1
      %p46 = por %p44, %p45
      %p47 = scmp.ne.s32.totalorder %s36, %s37
      %p48 = scmp.eq.s32.totalorder %s28, 0
      %p49 = por %p47, %p48
      %p50 = scmp.ne.s32.totalorder %s36, %s37
      %p51 = scmp.eq.s32.totalorder %s29, 1
      %p52 = por %p50, %p51
      %p54 = scmp.ne.s32.totalorder %s37, %s53
      %p55 = scmp.eq.s32.totalorder %s29, 0
      %p56 = por %p54, %p55
      %s58 = sadd.s32 %s57, 1
      %p61 = scmp.eq.s32.totalorder %s23, 1
      %p62 = scmp.ne.s32.totalorder %s57, %s59
      %p63 = scmp.eq.s32.totalorder %s23, 0
      %p64 = por %p62, %p63
      %p65 = scmp.ne.s32.totalorder %s57, %s59
      %p66 = scmp.eq.s32.totalorder %s28, 1
      %p67 = por %p65, %p66
      %p68 = scmp.ne.s32.totalorder %s59, %s60
      %p69 = scmp.eq.s32.totalorder %s28, 0
      %p70 = por %p68, %p69
      %p71 = scmp.ne.s32.totalorder %s59, %s60
      %p72 = scmp.eq.s32.totalorder %s29, 1
      %p73 = por %p71, %p72
      %p75 = scmp.ne.s32.totalorder %s60, %s74
      %p76 = scmp.eq.s32.totalorder %s29, 0
      %p77 = por %p75, %p76
      %s79 = sadd.s32 %s78, 1
      %p82 = scmp.eq.s32.totalorder %s23, 1
      %p83 = scmp.ne.s32.totalorder %s78, %s80
      %p84 = scmp.eq.s32.totalorder %s23, 0
      %p85 = por %p83, %p84
      %p86 = scmp.ne.s32.totalorder %s78, %s80
      %p87 = scmp.eq.s32.totalorder %s28, 1
      %p88 = por %p86, %p87
      %p89 = scmp.ne.s32.totalorder %s80, %s81
      %p90 = scmp.eq.s32.totalorder %s28, 0
      %p91 = por %p89, %p90
      %p92 = scmp.ne.s32.totalorder %s80, %s81
      %p93 = scmp.eq.s32.totalorder %s29, 1
      %p94 = por %p92, %p93
      %p96 = scmp.ne.s32.totalorder %s81, %s95
      %p97 = scmp.eq.s32.totalorder %s29, 0
      %p98 = por %p96, %p97
      %s100 = sadd.s32 %s99, 1
      %p103 = scmp.eq.s32.totalorder %s23, 1
      %p104 = scmp.ne.s32.totalorder %s99, %s101
      %p105 = scmp.eq.s32.totalorder %s23, 0
      %p106 = por %p104, %p105
      %p107 = scmp.ne.s32.totalorder %s99, %s101
      %p108 = scmp.eq.s32.totalorder %s28, 1
      %p109 = por %p107, %p108
      %p110 = scmp.ne.s32.totalorder %s101, %s102
      %p111 = scmp.eq.s32.totalorder %s28, 0
      %p112 = por %p110, %p111
      %p113 = scmp.ne.s32.totalorder %s101, %s102
      %p114 = scmp.eq.s32.totalorder %s29, 1
      %p115 = por %p113, %p114
      %p117 = scmp.ne.s32.totalorder %s102, %s116
      %p118 = scmp.eq.s32.totalorder %s29, 0
      %p119 = por %p117, %p118
      %s121 = sadd.s32 %s120, 1
      %p124 = scmp.eq.s32.totalorder %s23, 1
      %p125 = scmp.ne.s32.totalorder %s120, %s122
      %p126 = scmp.eq.s32.totalorder %s23, 0
      %p127 = por %p125, %p126
      %p128 = scmp.ne.s32.totalorder %s120, %s122
      %p129 = scmp.eq.s32.totalorder %s28, 1
      %p130 = por %p128, %p129
      %p131 = scmp.ne.s32.totalorder %s122, %s123
      %p132 = scmp.eq.s32.totalorder %s28, 0
      %p133 = por %p131, %p132
      %p134 = scmp.ne.s32.totalorder %s122, %s123
      %p135 = scmp.eq.s32.totalorder %s29, 1
      %p136 = por %p134, %p135
      %p138 = scmp.ne.s32.totalorder %s123, %s137
      %p139 = scmp.eq.s32.totalorder %s29, 0
      %p140 = por %p138, %p139
      %s142 = sadd.s32 %s141, 1
      %p145 = scmp.eq.s32.totalorder %s23, 1
      %p146 = scmp.ne.s32.totalorder %s141, %s143
      %p147 = scmp.eq.s32.totalorder %s23, 0
      %p148 = por %p146, %p147
      %p149 = scmp.ne.s32.totalorder %s141, %s143
      %p150 = scmp.eq.s32.totalorder %s28, 1
      %p151 = por %p149, %p150
      %p152 = scmp.ne.s32.totalorder %s143, %s144
      %p153 = scmp.eq.s32.totalorder %s28, 0
      %p154 = por %p152, %p153
      %p155 = scmp.ne.s32.totalorder %s143, %s144
      %p156 = scmp.eq.s32.totalorder %s29, 1
      %p157 = por %p155, %p156
      %p159 = scmp.ne.s32.totalorder %s144, %s158
      %p160 = scmp.eq.s32.totalorder %s29, 0
      %p161 = por %p159, %p160
      %s163 = sadd.s32 %s162, 1
      %p166 = scmp.eq.s32.totalorder %s23, 1
      %p167 = scmp.ne.s32.totalorder %s162, %s164
      %p168 = scmp.eq.s32.totalorder %s23, 0
      %p169 = por %p167, %p168
      %p170 = scmp.ne.s32.totalorder %s162, %s164
      %p171 = scmp.eq.s32.totalorder %s28, 1
      %p172 = por %p170, %p171
      %p173 = scmp.ne.s32.totalorder %s164, %s165
      %p174 = scmp.eq.s32.totalorder %s28, 0
      %p175 = por %p173, %p174
      %p176 = scmp.ne.s32.totalorder %s164, %s165
      %p177 = scmp.eq.s32.totalorder %s29, 1
      %p178 = por %p176, %p177
      %p180 = scmp.ne.s32.totalorder %s165, %s179
      %p181 = scmp.eq.s32.totalorder %s29, 0
      %p182 = por %p180, %p181
      %s184 = sadd.s32 %s183, 1
      %p187 = scmp.eq.s32.totalorder %s23, 1
      %p188 = scmp.ne.s32.totalorder %s183, %s185
      %p189 = scmp.eq.s32.totalorder %s23, 0
      %p190 = por %p188, %p189
      %p191 = scmp.ne.s32.totalorder %s183, %s185
      %p192 = scmp.eq.s32.totalorder %s28, 1
      %p193 = por %p191, %p192
      %p194 = scmp.ne.s32.totalorder %s185, %s186
      %p195 = scmp.eq.s32.totalorder %s28, 0
      %p196 = por %p194, %p195
      %p197 = scmp.ne.s32.totalorder %s185, %s186
      %p198 = scmp.eq.s32.totalorder %s29, 1
      %p199 = por %p197, %p198
      %p201 = scmp.ne.s32.totalorder %s186, %s200
      %p202 = scmp.eq.s32.totalorder %s29, 0
      %p203 = por %p201, %p202
      %s205 = sadd.s32 %s204, 1
      %p208 = scmp.eq.s32.totalorder %s23, 1
      %p209 = scmp.ne.s32.totalorder %s204, %s206
      %p210 = scmp.eq.s32.totalorder %s23, 0
      %p211 = por %p209, %p210
      %p212 = scmp.ne.s32.totalorder %s204, %s206
      %p213 = scmp.eq.s32.totalorder %s28, 1
      %p214 = por %p212, %p213
      %p215 = scmp.ne.s32.totalorder %s206, %s207
      %p216 = scmp.eq.s32.totalorder %s28, 0
      %p217 = por %p215, %p216
      %p218 = scmp.ne.s32.totalorder %s206, %s207
      %p219 = scmp.eq.s32.totalorder %s29, 1
      %p220 = por %p218, %p219
      %p222 = scmp.ne.s32.totalorder %s207, %s221
      %p223 = scmp.eq.s32.totalorder %s29, 0
      %p224 = por %p222, %p223
      %s225 = ssub.s32 %s23, %s30
      %p226 = scmp.eq.s32.totalorder %s225, 0
      %s228 = sadd.s32 %s227, 1
      %s229 = scalar_select %p226, %s227, %s228
      %p232 = pneg %p226
      %p233 = scmp.eq.s32.totalorder %s23, 1
      %p234 = por %p232, %p233
      %p235 = scmp.ne.s32.totalorder %s227, %s230
      %p236 = scmp.eq.s32.totalorder %s23, 0
      %p237 = por %p235, %p236
      %p238 = scmp.ne.s32.totalorder %s227, %s230
      %p239 = scmp.eq.s32.totalorder %s28, 1
      %p240 = por %p238, %p239
      %p241 = scmp.ne.s32.totalorder %s230, %s231
      %p242 = scmp.eq.s32.totalorder %s28, 0
      %p243 = por %p241, %p242
      %p244 = scmp.ne.s32.totalorder %s230, %s231
      %p245 = scmp.eq.s32.totalorder %s29, 1
      %p246 = por %p244, %p245
      %p248 = scmp.ne.s32.totalorder %s231, %s247
      %p249 = scmp.eq.s32.totalorder %s29, 0
      %p250 = por %p248, %p249
      %p251 = scmp.le.s32.totalorder 1, %s23
      %p252 = scmp.lt.s32.totalorder %s23, 3
      %p253 = pnand %p251, %p252
      %p254 = pneg %p253
      // Predicated region
      $region9: #{tpu_custom_call.1} parent=5 // pred_check
        _
      $region10: #{tpu_custom_call.1} parent=5 // pred_check_branch
        %256 = sbr.rel (%p253) target = $region12
      $region11: #{tpu_custom_call.1} parent=5 // pred_region
        %s257 = ssub.s32 %s23, 1
        // Predicated region
        $region13: #{tpu_custom_call.1} parent=11 // pred_check
          %p258 = pneg %p70
        $region14: #{tpu_custom_call.1} parent=11 // pred_check_branch
          %260 = sbr.rel (%p258) target = $region16
        $region15: #{tpu_custom_call.1} parent=11 // pred_region
          %s262 = ssub.s32 4096, 4096
          %263 = vsyncadd [#allocation6], %s262
          %s264 = sshll.u32 [#allocation5], 4
          %s265 = int_to_ptr.vmem [resolvable:$true] %s264
          %270 = dma.hbm_to_vmem [thread:$0]  %s1, 4096, %s265, [#allocation6], 128, 128, 8
        $region16: #{tpu_custom_call.1} parent=11 // pred_fallthru
          _
        // Predicated region
        $region17: #{tpu_custom_call.1} parent=11 // pred_check
          %p271 = pneg %p91
        $region18: #{tpu_custom_call.1} parent=11 // pred_check_branch
          %273 = sbr.rel (%p271) target = $region20
        $region19: #{tpu_custom_call.1} parent=11 // pred_region
          _
        $region20: #{tpu_custom_call.1} parent=11 // pred_fallthru
          _
        // Predicated region
        $region21: #{tpu_custom_call.1} parent=11 // pred_check
          %p274 = pneg %p112
        $region22: #{tpu_custom_call.1} parent=11 // pred_check_branch
          %276 = sbr.rel (%p274) target = $region24
        $region23: #{tpu_custom_call.1} parent=11 // pred_region
          %s278 = ssub.s32 2048, 2048
          %279 = vsyncadd [#allocation6], %s278
          %s280 = sshll.u32 [#allocation7], 4
          %s281 = int_to_ptr.vmem [resolvable:$true] %s280
          %286 = dma.hbm_to_vmem [thread:$0]  %s3, 2048, %s281, [#allocation6], 128, 128, 8
        $region24: #{tpu_custom_call.1} parent=11 // pred_fallthru
          _
        // Predicated region
        $region25: #{tpu_custom_call.1} parent=11 // pred_check
          %p287 = pneg %p133
        $region26: #{tpu_custom_call.1} parent=11 // pred_check_branch
          %289 = sbr.rel (%p287) target = $region28
        $region27: #{tpu_custom_call.1} parent=11 // pred_region
          _
        $region28: #{tpu_custom_call.1} parent=11 // pred_fallthru
          _
        // Predicated region
        $region29: #{tpu_custom_call.1} parent=11 // pred_check
          %p290 = pneg %p154
        $region30: #{tpu_custom_call.1} parent=11 // pred_check_branch
          %292 = sbr.rel (%p290) target = $region32
        $region31: #{tpu_custom_call.1} parent=11 // pred_region
          %s294 = ssub.s32 4096, 4096
          %295 = vsyncadd [#allocation9], %s294
          %s296 = sshll.u32 [#allocation8], 4
          %s297 = int_to_ptr.vmem [resolvable:$true] %s296
          %302 = dma.hbm_to_vmem [thread:$0]  %s5, 4096, %s297, [#allocation9], 128, 128, 8
        $region32: #{tpu_custom_call.1} parent=11 // pred_fallthru
          _
        // Predicated region
        $region33: #{tpu_custom_call.1} parent=11 // pred_check
          %p303 = pneg %p175
        $region34: #{tpu_custom_call.1} parent=11 // pred_check_branch
          %305 = sbr.rel (%p303) target = $region36
        $region35: #{tpu_custom_call.1} parent=11 // pred_region
          _
        $region36: #{tpu_custom_call.1} parent=11 // pred_fallthru
          _
        // Predicated region
        $region37: #{tpu_custom_call.1} parent=11 // pred_check
          %p306 = pneg %p196
        $region38: #{tpu_custom_call.1} parent=11 // pred_check_branch
          %308 = sbr.rel (%p306) target = $region40
        $region39: #{tpu_custom_call.1} parent=11 // pred_region
          %s310 = ssub.s32 2048, 2048
          %311 = vsyncadd [#allocation9], %s310
          %s312 = sshll.u32 [#allocation10], 4
          %s313 = int_to_ptr.vmem [resolvable:$true] %s312
          %318 = dma.hbm_to_vmem [thread:$0]  %s7, 2048, %s313, [#allocation9], 128, 128, 8
        $region40: #{tpu_custom_call.1} parent=11 // pred_fallthru
          _
        // Predicated region
        $region41: #{tpu_custom_call.1} parent=11 // pred_check
          %p319 = pneg %p217
        $region42: #{tpu_custom_call.1} parent=11 // pred_check_branch
          %321 = sbr.rel (%p319) target = $region44
        $region43: #{tpu_custom_call.1} parent=11 // pred_region
          _
        $region44: #{tpu_custom_call.1} parent=11 // pred_fallthru
          _
      $region12: #{tpu_custom_call.1} parent=5 // pred_fallthru
        _
      %p322 = scmp.lt.s32.totalorder %s23, 2
      // Predicated region
      $region45: #{tpu_custom_call.1} parent=5 // pred_check
        %p323 = pneg %p322
      $region46: #{tpu_custom_call.1} parent=5 // pred_check_branch
        %325 = sbr.rel (%p323) target = $region48
      $region47: #{tpu_custom_call.1} parent=5 // pred_region
        // Predicated region
        $region49: #{tpu_custom_call.1} parent=47 // pred_check
          %p326 = pneg %p43
        $region50: #{tpu_custom_call.1} parent=47 // pred_check_branch
          %328 = sbr.rel (%p326) target = $region52
        $region51: #{tpu_custom_call.1} parent=47 // pred_region
          %s329 = sand.u32 %s33, 1
          %s330 = scalar_lea.sflag [#allocation3], %s329
          %s331 = sand.u32 %s33, 1
          %s332 = smul.addr %s331, 8
          %s333 = scalar_lea.vmem [#allocation2], %s332
          %s335 = ssub.s32 128, 128
          %336 = vsyncadd %s330, %s335
          %s337 = smul.addr %s23, 128
          %s338 = scalar_lea.hbm %s0, %s337
          %s340 = sshll.u32 %s333, 4
          %s341 = int_to_ptr.vmem [resolvable:$true] %s340
          %343 = dma.hbm_to_vmem [thread:$0]  %s338, 128, %s341, %s330
        $region52: #{tpu_custom_call.1} parent=47 // pred_fallthru
          _
      $region48: #{tpu_custom_call.1} parent=5 // pred_fallthru
        _
      %p344 = scmp.le.s32.totalorder 1, %s23
      %p345 = scmp.lt.s32.totalorder %s23, 3
      %p346 = pnand %p344, %p345
      %p347 = pneg %p346
      // Predicated region
      $region53: #{tpu_custom_call.1} parent=5 // pred_check
        _
      $region54: #{tpu_custom_call.1} parent=5 // pred_check_branch
        %349 = sbr.rel (%p346) target = $region56
      $region55: #{tpu_custom_call.1} parent=5 // pred_region
        %s350 = ssub.s32 %s23, 1
        %s351 = sand.u32 %s36, 1
        %s352 = scalar_lea.sflag [#allocation3], %s351
        %s353 = sand.u32 %s36, 1
        %s354 = smul.addr %s353, 8
        %s355 = scalar_lea.vmem [#allocation2], %s354
        // Predicated region
        $region57: #{tpu_custom_call.1} parent=55 // pred_check
          %p356 = pneg %p49
        $region58: #{tpu_custom_call.1} parent=55 // pred_check_branch
          %358 = sbr.rel (%p356) target = $region60
        $region59: #{tpu_custom_call.1} parent=55 // pred_region
          %359 = dma.done %s352, 128
        $region60: #{tpu_custom_call.1} parent=55 // pred_fallthru
          _
        // Predicated region
        $region61: #{tpu_custom_call.1} parent=55 // pred_check
          %p360 = pneg %p70
        $region62: #{tpu_custom_call.1} parent=55 // pred_check_branch
          %362 = sbr.rel (%p360) target = $region64
        $region63: #{tpu_custom_call.1} parent=55 // pred_region
          %363 = dma.done [#allocation6], 4096
        $region64: #{tpu_custom_call.1} parent=55 // pred_fallthru
          _
        // Predicated region
        $region65: #{tpu_custom_call.1} parent=55 // pred_check
          %p364 = pneg %p112
        $region66: #{tpu_custom_call.1} parent=55 // pred_check_branch
          %366 = sbr.rel (%p364) target = $region68
        $region67: #{tpu_custom_call.1} parent=55 // pred_region
          %367 = dma.done [#allocation6], 2048
        $region68: #{tpu_custom_call.1} parent=55 // pred_fallthru
          _
        // Predicated region
        $region69: #{tpu_custom_call.1} parent=55 // pred_check
          %p368 = pneg %p154
        $region70: #{tpu_custom_call.1} parent=55 // pred_check_branch
          %370 = sbr.rel (%p368) target = $region72
        $region71: #{tpu_custom_call.1} parent=55 // pred_region
          %371 = dma.done [#allocation9], 4096
        $region72: #{tpu_custom_call.1} parent=55 // pred_fallthru
          _
        // Predicated region
        $region73: #{tpu_custom_call.1} parent=55 // pred_check
          %p372 = pneg %p196
        $region74: #{tpu_custom_call.1} parent=55 // pred_check_branch
          %374 = sbr.rel (%p372) target = $region76
        $region75: #{tpu_custom_call.1} parent=55 // pred_region
          %375 = dma.done [#allocation9], 2048
        $region76: #{tpu_custom_call.1} parent=55 // pred_fallthru
          _
        %s376 = sand.u32 %s36, 1
        %s377 = scalar_lea.sflag [#allocation3], %s376
        %s378 = sand.u32 %s36, 1
        %s379 = smul.addr %s378, 8
        %s380 = scalar_lea.vmem [#allocation2], %s379
        %p381 = pneg %p49
        %p382 = pneg %p46
        %p383 = pneg %p70
        %p384 = pneg %p67
        %p385 = pneg %p91
        %p386 = pneg %p88
        %p387 = pneg %p112
        %p388 = pneg %p109
        %p389 = pneg %p133
        %p390 = pneg %p130
        %p391 = pneg %p154
        %p392 = pneg %p151
        %p393 = pneg %p175
        %p394 = pneg %p172
        %p395 = pneg %p196
        %p396 = pneg %p193
        %p397 = pneg %p217
        %p398 = pneg %p214
        %p399 = pneg %p243
        %p400 = pneg %p240
        %s401 = sand.u32 %s230, 1
        %s402 = scalar_lea.sflag [#allocation4], %s401
        %s403 = sand.u32 %s230, 1
        %s404 = smul.addr %s403, 8
        %s405 = scalar_lea.vmem [#allocation11], %s404
        %v406 = vld [vmem:[%s355] sm:$0xff]
        %v407 = vld [vmem:[#allocation5] sm:$0xff]
        %v408 = vld [vmem:[#allocation5 + $0x8] sm:$0xff]
        %v409 = vld [vmem:[#allocation5 + $0x10] sm:$0xff]
        %v410 = vld [vmem:[#allocation5 + $0x18] sm:$0xff]
        %v411 = vld [vmem:[#allocation5 + $0x20] sm:$0xff]
        %v412 = vld [vmem:[#allocation5 + $0x28] sm:$0xff]
        %v413 = vld [vmem:[#allocation5 + $0x30] sm:$0xff]
        %v414 = vld [vmem:[#allocation5 + $0x38] sm:$0xff]
        %v415 = vld [vmem:[#allocation5 + $0x40] sm:$0xff]
        %v416 = vld [vmem:[#allocation5 + $0x48] sm:$0xff]
        %v417 = vld [vmem:[#allocation5 + $0x50] sm:$0xff]
        %v418 = vld [vmem:[#allocation5 + $0x58] sm:$0xff]
        %v419 = vld [vmem:[#allocation5 + $0x60] sm:$0xff]
        %v420 = vld [vmem:[#allocation5 + $0x68] sm:$0xff]
        %v421 = vld [vmem:[#allocation5 + $0x70] sm:$0xff]
        %v422 = vld [vmem:[#allocation5 + $0x78] sm:$0xff]
        %v423 = vld [vmem:[#allocation5 + $0x80] sm:$0xff]
        %v424 = vld [vmem:[#allocation5 + $0x88] sm:$0xff]
        %v425 = vld [vmem:[#allocation5 + $0x90] sm:$0xff]
        %v426 = vld [vmem:[#allocation5 + $0x98] sm:$0xff]
        %v427 = vld [vmem:[#allocation5 + $0xa0] sm:$0xff]
        %v428 = vld [vmem:[#allocation5 + $0xa8] sm:$0xff]
        %v429 = vld [vmem:[#allocation5 + $0xb0] sm:$0xff]
        %v430 = vld [vmem:[#allocation5 + $0xb8] sm:$0xff]
        %v431 = vld [vmem:[#allocation5 + $0xc0] sm:$0xff]
        %v432 = vld [vmem:[#allocation5 + $0xc8] sm:$0xff]
        %v433 = vld [vmem:[#allocation5 + $0xd0] sm:$0xff]
        %v434 = vld [vmem:[#allocation5 + $0xd8] sm:$0xff]
        %v435 = vld [vmem:[#allocation5 + $0xe0] sm:$0xff]
        %v436 = vld [vmem:[#allocation5 + $0xe8] sm:$0xff]
        %v437 = vld [vmem:[#allocation5 + $0xf0] sm:$0xff]
        %v438 = vld [vmem:[#allocation5 + $0xf8] sm:$0xff]
        %v440 = vrot.slane %v406, 1
        %442 = vmatprep.subr.mxu0 0.0
        %443 = vmatpush1.msra.mxu0 %v423
        %444 = vmatprep.subr.mxu0 0.0
        %445 = vmatpush1.msra.mxu0 %v424
        %446 = vmatprep.subr.mxu0 0.0
        %447 = vmatpush1.msra.mxu0 %v425
        %448 = vmatprep.subr.mxu0 0.0
        %449 = vmatpush1.msra.mxu0 %v426
        %450 = vmatprep.subr.mxu0 0.0
        %451 = vmatpush1.msra.mxu0 %v427
        %452 = vmatprep.subr.mxu0 0.0
        %453 = vmatpush1.msra.mxu0 %v428
        %454 = vmatprep.subr.mxu0 0.0
        %455 = vmatpush1.msra.mxu0 %v429
        %456 = vmatprep.subr.mxu0 0.0
        %457 = vmatpush1.msra.mxu0 %v430
        %458 = vmatprep.subr.mxu0 0.0
        %459 = vmatpush1.msra.mxu0 %v431
        %460 = vmatprep.subr.mxu0 0.0
        %461 = vmatpush1.msra.mxu0 %v432
        %462 = vmatprep.subr.mxu0 0.0
        %463 = vmatpush1.msra.mxu0 %v433
        %464 = vmatprep.subr.mxu0 0.0
        %465 = vmatpush1.msra.mxu0 %v434
        %466 = vmatprep.subr.mxu0 0.0
        %467 = vmatpush1.msra.mxu0 %v435
        %468 = vmatprep.subr.mxu0 0.0
        %469 = vmatpush1.msra.mxu0 %v436
        %470 = vmatprep.subr.mxu0 0.0
        %471 = vmatpush1.msra.mxu0 %v437
        %472 = vmatprep.subr.mxu0 0.0
        %473 = vmatpush1.msra.mxu0 %v438
        %474 = vmatprep.subr.mxu0 0.0
        %475 = vmatpush1.msra.mxu0 0.0
        %476 = vmatprep.subr.mxu0 0.0
        %477 = vmatpush1.msra.mxu0 0.0
        %478 = vmatprep.subr.mxu0 0.0
        %479 = vmatpush1.msra.mxu0 0.0
        %480 = vmatprep.subr.mxu0 0.0
        %481 = vmatpush1.msra.mxu0 0.0
        %482 = vmatprep.subr.mxu0 0.0
        %483 = vmatpush1.msra.mxu0 0.0
        %484 = vmatprep.subr.mxu0 0.0
        %485 = vmatpush1.msra.mxu0 0.0
        %486 = vmatprep.subr.mxu0 0.0
        %487 = vmatpush1.msra.mxu0 0.0
        %488 = vmatprep.subr.mxu0 0.0
        %489 = vmatpush1.msra.mxu0 0.0
        %490 = vmatprep.subr.mxu0 0.0
        %491 = vmatpush1.msra.mxu0 0.0
        %492 = vmatprep.subr.mxu0 0.0
        %493 = vmatpush1.msra.mxu0 0.0
        %494 = vmatprep.subr.mxu0 0.0
        %495 = vmatpush1.msra.mxu0 0.0
        %496 = vmatprep.subr.mxu0 0.0
        %497 = vmatpush1.msra.mxu0 0.0
        %498 = vmatprep.subr.mxu0 0.0
        %499 = vmatpush1.msra.mxu0 0.0
        %500 = vmatprep.subr.mxu0 0.0
        %501 = vmatpush1.msra.mxu0 0.0
        %502 = vmatprep.subr.mxu0 0.0
        %503 = vmatpush1.msra.mxu0 0.0
        %504 = vmatprep.subr.mxu0 0.0
        %505 = vmatpush1.msra.mxu0 0.0
        %506 = vmatprep.mubr.f32.mxu0 0.0
        %507 = vmatmul.mubr.f32.gmra.mrb[0].mxu0 %v440
        %v508 = vpop.f32.mrb[0].mxu0
        %v509 = vadd.f32 0.0, %v508
        %v510 = vpop.f32.mrb[0].mxu0
        %511 = vdwg.mxu0
        %512 = vmatprep.subr.mxu0 0.0
        %513 = vmatpush1.msra.mxu0 %v407
        %514 = vmatprep.subr.mxu0 0.0
        %515 = vmatpush1.msra.mxu0 %v408
        %516 = vmatprep.subr.mxu0 0.0
        %517 = vmatpush1.msra.mxu0 %v409
        %518 = vmatprep.subr.mxu0 0.0
        %519 = vmatpush1.msra.mxu0 %v410
        %520 = vmatprep.subr.mxu0 0.0
        %521 = vmatpush1.msra.mxu0 %v411
        %522 = vmatprep.subr.mxu0 0.0
        %523 = vmatpush1.msra.mxu0 %v412
        %524 = vmatprep.subr.mxu0 0.0
        %525 = vmatpush1.msra.mxu0 %v413
        %526 = vmatprep.subr.mxu0 0.0
        %527 = vmatpush1.msra.mxu0 %v414
        %528 = vmatprep.subr.mxu0 0.0
        %529 = vmatpush1.msra.mxu0 %v415
        %530 = vmatprep.subr.mxu0 0.0
        %531 = vmatpush1.msra.mxu0 %v416
        %532 = vmatprep.subr.mxu0 0.0
        %533 = vmatpush1.msra.mxu0 %v417
        %534 = vmatprep.subr.mxu0 0.0
        %535 = vmatpush1.msra.mxu0 %v418
        %536 = vmatprep.subr.mxu0 0.0
        %537 = vmatpush1.msra.mxu0 %v419
        %538 = vmatprep.subr.mxu0 0.0
        %539 = vmatpush1.msra.mxu0 %v420
        %540 = vmatprep.subr.mxu0 0.0
        %541 = vmatpush1.msra.mxu0 %v421
        %542 = vmatprep.subr.mxu0 0.0
        %543 = vmatpush1.msra.mxu0 %v422
        %544 = vmatprep.subr.mxu0 0.0
        %545 = vmatpush1.msra.mxu0 0.0
        %546 = vmatprep.subr.mxu0 0.0
        %547 = vmatpush1.msra.mxu0 0.0
        %548 = vmatprep.subr.mxu0 0.0
        %549 = vmatpush1.msra.mxu0 0.0
        %550 = vmatprep.subr.mxu0 0.0
        %551 = vmatpush1.msra.mxu0 0.0
        %552 = vmatprep.subr.mxu0 0.0
        %553 = vmatpush1.msra.mxu0 0.0
        %554 = vmatprep.subr.mxu0 0.0
        %555 = vmatpush1.msra.mxu0 0.0
        %556 = vmatprep.subr.mxu0 0.0
        %557 = vmatpush1.msra.mxu0 0.0
        %558 = vmatprep.subr.mxu0 0.0
        %559 = vmatpush1.msra.mxu0 0.0
        %560 = vmatprep.subr.mxu0 0.0
        %561 = vmatpush1.msra.mxu0 0.0
        %562 = vmatprep.subr.mxu0 0.0
        %563 = vmatpush1.msra.mxu0 0.0
        %564 = vmatprep.subr.mxu0 0.0
        %565 = vmatpush1.msra.mxu0 0.0
        %566 = vmatprep.subr.mxu0 0.0
        %567 = vmatpush1.msra.mxu0 0.0
        %568 = vmatprep.subr.mxu0 0.0
        %569 = vmatpush1.msra.mxu0 0.0
        %570 = vmatprep.subr.mxu0 0.0
        %571 = vmatpush1.msra.mxu0 0.0
        %572 = vmatprep.subr.mxu0 0.0
        %573 = vmatpush1.msra.mxu0 0.0
        %574 = vmatprep.subr.mxu0 0.0
        %575 = vmatpush1.msra.mxu0 0.0
        %576 = vmatprep.mubr.f32.mxu0 0.0
        %577 = vmatmul.mubr.f32.gmra.mrb[0].mxu0 %v406
        %v578 = vpop.f32.mrb[0].mxu0
        %v579 = vadd.f32 %v509, %v578
        %v580 = vpop.f32.mrb[0].mxu0
        %581 = vdwg.mxu0
        %v582 = vld [vmem:[%s2] sm:$0x1]
        %v584 = vlaneseq
        %v585 = vshrl.u32 %v584, 7
        %v586 = vsub.s32 0, %v585
        %v587 = vrot.slane %v582, %v586
        %v589 = vadd.f32 %v579, %v587
        %v590 = vmax.f32 %v589, 0.0
        %v591 = vld [vmem:[#allocation7] sm:$0xff]
        %v592 = vld [vmem:[#allocation7 + $0x8] sm:$0xff]
        %v593 = vld [vmem:[#allocation7 + $0x10] sm:$0xff]
        %v594 = vld [vmem:[#allocation7 + $0x18] sm:$0xff]
        %v595 = vld [vmem:[#allocation7 + $0x20] sm:$0xff]
        %v596 = vld [vmem:[#allocation7 + $0x28] sm:$0xff]
        %v597 = vld [vmem:[#allocation7 + $0x30] sm:$0xff]
        %v598 = vld [vmem:[#allocation7 + $0x38] sm:$0xff]
        %v599 = vld [vmem:[#allocation7 + $0x40] sm:$0xff]
        %v600 = vld [vmem:[#allocation7 + $0x48] sm:$0xff]
        %v601 = vld [vmem:[#allocation7 + $0x50] sm:$0xff]
        %v602 = vld [vmem:[#allocation7 + $0x58] sm:$0xff]
        %v603 = vld [vmem:[#allocation7 + $0x60] sm:$0xff]
        %v604 = vld [vmem:[#allocation7 + $0x68] sm:$0xff]
        %v605 = vld [vmem:[#allocation7 + $0x70] sm:$0xff]
        %v606 = vld [vmem:[#allocation7 + $0x78] sm:$0xff]
        %v607 = vld [vmem:[%s4] sm:$0x1]
        %v609 = vlaneseq
        %v610 = vshrl.u32 %v609, 7
        %v611 = vsub.s32 0, %v610
        %v612 = vrot.slane %v607, %v611
        %614 = vmatprep.subr.mxu0 0.0
        %615 = vmatpush1.msra.mxu0 %v591
        %616 = vmatprep.subr.mxu0 0.0
        %617 = vmatpush1.msra.mxu0 %v592
        %618 = vmatprep.subr.mxu0 0.0
        %619 = vmatpush1.msra.mxu0 %v593
        %620 = vmatprep.subr.mxu0 0.0
        %621 = vmatpush1.msra.mxu0 %v594
        %622 = vmatprep.subr.mxu0 0.0
        %623 = vmatpush1.msra.mxu0 %v595
        %624 = vmatprep.subr.mxu0 0.0
        %625 = vmatpush1.msra.mxu0 %v596
        %626 = vmatprep.subr.mxu0 0.0
        %627 = vmatpush1.msra.mxu0 %v597
        %628 = vmatprep.subr.mxu0 0.0
        %629 = vmatpush1.msra.mxu0 %v598
        %630 = vmatprep.subr.mxu0 0.0
        %631 = vmatpush1.msra.mxu0 %v599
        %632 = vmatprep.subr.mxu0 0.0
        %633 = vmatpush1.msra.mxu0 %v600
        %634 = vmatprep.subr.mxu0 0.0
        %635 = vmatpush1.msra.mxu0 %v601
        %636 = vmatprep.subr.mxu0 0.0
        %637 = vmatpush1.msra.mxu0 %v602
        %638 = vmatprep.subr.mxu0 0.0
        %639 = vmatpush1.msra.mxu0 %v603
        %640 = vmatprep.subr.mxu0 0.0
        %641 = vmatpush1.msra.mxu0 %v604
        %642 = vmatprep.subr.mxu0 0.0
        %643 = vmatpush1.msra.mxu0 %v605
        %644 = vmatprep.subr.mxu0 0.0
        %645 = vmatpush1.msra.mxu0 %v606
        %646 = vmatprep.subr.mxu0 0.0
        %647 = vmatpush1.msra.mxu0 0.0
        %648 = vmatprep.subr.mxu0 0.0
        %649 = vmatpush1.msra.mxu0 0.0
        %650 = vmatprep.subr.mxu0 0.0
        %651 = vmatpush1.msra.mxu0 0.0
        %652 = vmatprep.subr.mxu0 0.0
        %653 = vmatpush1.msra.mxu0 0.0
        %654 = vmatprep.subr.mxu0 0.0
        %655 = vmatpush1.msra.mxu0 0.0
        %656 = vmatprep.subr.mxu0 0.0
        %657 = vmatpush1.msra.mxu0 0.0
        %658 = vmatprep.subr.mxu0 0.0
        %659 = vmatpush1.msra.mxu0 0.0
        %660 = vmatprep.subr.mxu0 0.0
        %661 = vmatpush1.msra.mxu0 0.0
        %662 = vmatprep.subr.mxu0 0.0
        %663 = vmatpush1.msra.mxu0 0.0
        %664 = vmatprep.subr.mxu0 0.0
        %665 = vmatpush1.msra.mxu0 0.0
        %666 = vmatprep.subr.mxu0 0.0
        %667 = vmatpush1.msra.mxu0 0.0
        %668 = vmatprep.subr.mxu0 0.0
        %669 = vmatpush1.msra.mxu0 0.0
        %670 = vmatprep.subr.mxu0 0.0
        %671 = vmatpush1.msra.mxu0 0.0
        %672 = vmatprep.subr.mxu0 0.0
        %673 = vmatpush1.msra.mxu0 0.0
        %674 = vmatprep.subr.mxu0 0.0
        %675 = vmatpush1.msra.mxu0 0.0
        %676 = vmatprep.subr.mxu0 0.0
        %677 = vmatpush1.msra.mxu0 0.0
        %678 = vmatprep.mubr.f32.mxu0 0.0
        %679 = vmatmul.mubr.f32.gmra.mrb[0].mxu0 %v590
        %v680 = vpop.f32.mrb[0].mxu0
        %v681 = vadd.f32 %v612, %v680
        %v682 = vpop.f32.mrb[0].mxu0
        %683 = vdwg.mxu0
        %v684 = vmul.f32 %v681, %v681
        %vm685 = vcmask 1046528
        %v686 = vsel %vm685, %v684, 0.0
        %687 = vadd.xlane.f32.xlu0 %v686
        %v688 = vpop.xlane.xlu0 %687
        %v689 = vmax.f32 %v688, 1e-24
        %v690 = vrsqrt.pop %v689
        %v691 = vmul.f32 %v681, %v690
        %v692 = vld [vmem:[#allocation8] sm:$0xff]
        %v693 = vld [vmem:[#allocation8 + $0x8] sm:$0xff]
        %v694 = vld [vmem:[#allocation8 + $0x10] sm:$0xff]
        %v695 = vld [vmem:[#allocation8 + $0x18] sm:$0xff]
        %v696 = vld [vmem:[#allocation8 + $0x20] sm:$0xff]
        %v697 = vld [vmem:[#allocation8 + $0x28] sm:$0xff]
        %v698 = vld [vmem:[#allocation8 + $0x30] sm:$0xff]
        %v699 = vld [vmem:[#allocation8 + $0x38] sm:$0xff]
        %v700 = vld [vmem:[#allocation8 + $0x40] sm:$0xff]
        %v701 = vld [vmem:[#allocation8 + $0x48] sm:$0xff]
        %v702 = vld [vmem:[#allocation8 + $0x50] sm:$0xff]
        %v703 = vld [vmem:[#allocation8 + $0x58] sm:$0xff]
        %v704 = vld [vmem:[#allocation8 + $0x60] sm:$0xff]
        %v705 = vld [vmem:[#allocation8 + $0x68] sm:$0xff]
        %v706 = vld [vmem:[#allocation8 + $0x70] sm:$0xff]
        %v707 = vld [vmem:[#allocation8 + $0x78] sm:$0xff]
        %v708 = vld [vmem:[#allocation8 + $0x80] sm:$0xff]
        %v709 = vld [vmem:[#allocation8 + $0x88] sm:$0xff]
        %v710 = vld [vmem:[#allocation8 + $0x90] sm:$0xff]
        %v711 = vld [vmem:[#allocation8 + $0x98] sm:$0xff]
        %v712 = vld [vmem:[#allocation8 + $0xa0] sm:$0xff]
        %v713 = vld [vmem:[#allocation8 + $0xa8] sm:$0xff]
        %v714 = vld [vmem:[#allocation8 + $0xb0] sm:$0xff]
        %v715 = vld [vmem:[#allocation8 + $0xb8] sm:$0xff]
        %v716 = vld [vmem:[#allocation8 + $0xc0] sm:$0xff]
        %v717 = vld [vmem:[#allocation8 + $0xc8] sm:$0xff]
        %v718 = vld [vmem:[#allocation8 + $0xd0] sm:$0xff]
        %v719 = vld [vmem:[#allocation8 + $0xd8] sm:$0xff]
        %v720 = vld [vmem:[#allocation8 + $0xe0] sm:$0xff]
        %v721 = vld [vmem:[#allocation8 + $0xe8] sm:$0xff]
        %v722 = vld [vmem:[#allocation8 + $0xf0] sm:$0xff]
        %v723 = vld [vmem:[#allocation8 + $0xf8] sm:$0xff]
        %724 = vmatprep.subr.mxu0 0.0
        %725 = vmatpush1.msra.mxu0 %v708
        %726 = vmatprep.subr.mxu0 0.0
        %727 = vmatpush1.msra.mxu0 %v709
        %728 = vmatprep.subr.mxu0 0.0
        %729 = vmatpush1.msra.mxu0 %v710
        %730 = vmatprep.subr.mxu0 0.0
        %731 = vmatpush1.msra.mxu0 %v711
        %732 = vmatprep.subr.mxu0 0.0
        %733 = vmatpush1.msra.mxu0 %v712
        %734 = vmatprep.subr.mxu0 0.0
        %735 = vmatpush1.msra.mxu0 %v713
        %736 = vmatprep.subr.mxu0 0.0
        %737 = vmatpush1.msra.mxu0 %v714
        %738 = vmatprep.subr.mxu0 0.0
        %739 = vmatpush1.msra.mxu0 %v715
        %740 = vmatprep.subr.mxu0 0.0
        %741 = vmatpush1.msra.mxu0 %v716
        %742 = vmatprep.subr.mxu0 0.0
        %743 = vmatpush1.msra.mxu0 %v717
        %744 = vmatprep.subr.mxu0 0.0
        %745 = vmatpush1.msra.mxu0 %v718
        %746 = vmatprep.subr.mxu0 0.0
        %747 = vmatpush1.msra.mxu0 %v719
        %748 = vmatprep.subr.mxu0 0.0
        %749 = vmatpush1.msra.mxu0 %v720
        %750 = vmatprep.subr.mxu0 0.0
        %751 = vmatpush1.msra.mxu0 %v721
        %752 = vmatprep.subr.mxu0 0.0
        %753 = vmatpush1.msra.mxu0 %v722
        %754 = vmatprep.subr.mxu0 0.0
        %755 = vmatpush1.msra.mxu0 %v723
        %756 = vmatprep.subr.mxu0 0.0
        %757 = vmatpush1.msra.mxu0 0.0
        %758 = vmatprep.subr.mxu0 0.0
        %759 = vmatpush1.msra.mxu0 0.0
        %760 = vmatprep.subr.mxu0 0.0
        %761 = vmatpush1.msra.mxu0 0.0
        %762 = vmatprep.subr.mxu0 0.0
        %763 = vmatpush1.msra.mxu0 0.0
        %764 = vmatprep.subr.mxu0 0.0
        %765 = vmatpush1.msra.mxu0 0.0
        %766 = vmatprep.subr.mxu0 0.0
        %767 = vmatpush1.msra.mxu0 0.0
        %768 = vmatprep.subr.mxu0 0.0
        %769 = vmatpush1.msra.mxu0 0.0
        %770 = vmatprep.subr.mxu0 0.0
        %771 = vmatpush1.msra.mxu0 0.0
        %772 = vmatprep.subr.mxu0 0.0
        %773 = vmatpush1.msra.mxu0 0.0
        %774 = vmatprep.subr.mxu0 0.0
        %775 = vmatpush1.msra.mxu0 0.0
        %776 = vmatprep.subr.mxu0 0.0
        %777 = vmatpush1.msra.mxu0 0.0
        %778 = vmatprep.subr.mxu0 0.0
        %779 = vmatpush1.msra.mxu0 0.0
        %780 = vmatprep.subr.mxu0 0.0
        %781 = vmatpush1.msra.mxu0 0.0
        %782 = vmatprep.subr.mxu0 0.0
        %783 = vmatpush1.msra.mxu0 0.0
        %784 = vmatprep.subr.mxu0 0.0
        %785 = vmatpush1.msra.mxu0 0.0
        %786 = vmatprep.subr.mxu0 0.0
        %787 = vmatpush1.msra.mxu0 0.0
        %788 = vmatprep.mubr.f32.mxu0 0.0
        %789 = vmatmul.mubr.f32.gmra.mrb[0].mxu0 %v440
        %v790 = vpop.f32.mrb[0].mxu0
        %v791 = vadd.f32 0.0, %v790
        %v792 = vpop.f32.mrb[0].mxu0
        %793 = vdwg.mxu0
        %794 = vmatprep.subr.mxu0 0.0
        %795 = vmatpush1.msra.mxu0 %v692
        %796 = vmatprep.subr.mxu0 0.0
        %797 = vmatpush1.msra.mxu0 %v693
        %798 = vmatprep.subr.mxu0 0.0
        %799 = vmatpush1.msra.mxu0 %v694
        %800 = vmatprep.subr.mxu0 0.0
        %801 = vmatpush1.msra.mxu0 %v695
        %802 = vmatprep.subr.mxu0 0.0
        %803 = vmatpush1.msra.mxu0 %v696
        %804 = vmatprep.subr.mxu0 0.0
        %805 = vmatpush1.msra.mxu0 %v697
        %806 = vmatprep.subr.mxu0 0.0
        %807 = vmatpush1.msra.mxu0 %v698
        %808 = vmatprep.subr.mxu0 0.0
        %809 = vmatpush1.msra.mxu0 %v699
        %810 = vmatprep.subr.mxu0 0.0
        %811 = vmatpush1.msra.mxu0 %v700
        %812 = vmatprep.subr.mxu0 0.0
        %813 = vmatpush1.msra.mxu0 %v701
        %814 = vmatprep.subr.mxu0 0.0
        %815 = vmatpush1.msra.mxu0 %v702
        %816 = vmatprep.subr.mxu0 0.0
        %817 = vmatpush1.msra.mxu0 %v703
        %818 = vmatprep.subr.mxu0 0.0
        %819 = vmatpush1.msra.mxu0 %v704
        %820 = vmatprep.subr.mxu0 0.0
        %821 = vmatpush1.msra.mxu0 %v705
        %822 = vmatprep.subr.mxu0 0.0
        %823 = vmatpush1.msra.mxu0 %v706
        %824 = vmatprep.subr.mxu0 0.0
        %825 = vmatpush1.msra.mxu0 %v707
        %826 = vmatprep.subr.mxu0 0.0
        %827 = vmatpush1.msra.mxu0 0.0
        %828 = vmatprep.subr.mxu0 0.0
        %829 = vmatpush1.msra.mxu0 0.0
        %830 = vmatprep.subr.mxu0 0.0
        %831 = vmatpush1.msra.mxu0 0.0
        %832 = vmatprep.subr.mxu0 0.0
        %833 = vmatpush1.msra.mxu0 0.0
        %834 = vmatprep.subr.mxu0 0.0
        %835 = vmatpush1.msra.mxu0 0.0
        %836 = vmatprep.subr.mxu0 0.0
        %837 = vmatpush1.msra.mxu0 0.0
        %838 = vmatprep.subr.mxu0 0.0
        %839 = vmatpush1.msra.mxu0 0.0
        %840 = vmatprep.subr.mxu0 0.0
        %841 = vmatpush1.msra.mxu0 0.0
        %842 = vmatprep.subr.mxu0 0.0
        %843 = vmatpush1.msra.mxu0 0.0
        %844 = vmatprep.subr.mxu0 0.0
        %845 = vmatpush1.msra.mxu0 0.0
        %846 = vmatprep.subr.mxu0 0.0
        %847 = vmatpush1.msra.mxu0 0.0
        %848 = vmatprep.subr.mxu0 0.0
        %849 = vmatpush1.msra.mxu0 0.0
        %850 = vmatprep.subr.mxu0 0.0
        %851 = vmatpush1.msra.mxu0 0.0
        %852 = vmatprep.subr.mxu0 0.0
        %853 = vmatpush1.msra.mxu0 0.0
        %854 = vmatprep.subr.mxu0 0.0
        %855 = vmatpush1.msra.mxu0 0.0
        %856 = vmatprep.subr.mxu0 0.0
        %857 = vmatpush1.msra.mxu0 0.0
        %858 = vmatprep.mubr.f32.mxu0 0.0
        %859 = vmatmul.mubr.f32.gmra.mrb[0].mxu0 %v691
        %v860 = vpop.f32.mrb[0].mxu0
        %v861 = vadd.f32 %v791, %v860
        %v862 = vpop.f32.mrb[0].mxu0
        %863 = vdwg.mxu0
        %v864 = vld [vmem:[%s6] sm:$0x1]
        %v866 = vlaneseq
        %v867 = vshrl.u32 %v866, 7
        %v868 = vsub.s32 0, %v867
        %v869 = vrot.slane %v864, %v868
        %v871 = vadd.f32 %v861, %v869
        %v872 = vmax.f32 %v871, 0.0
        %v873 = vld [vmem:[#allocation10] sm:$0xff]
        %v874 = vld [vmem:[#allocation10 + $0x8] sm:$0xff]
        %v875 = vld [vmem:[#allocation10 + $0x10] sm:$0xff]
        %v876 = vld [vmem:[#allocation10 + $0x18] sm:$0xff]
        %v877 = vld [vmem:[#allocation10 + $0x20] sm:$0xff]
        %v878 = vld [vmem:[#allocation10 + $0x28] sm:$0xff]
        %v879 = vld [vmem:[#allocation10 + $0x30] sm:$0xff]
        %v880 = vld [vmem:[#allocation10 + $0x38] sm:$0xff]
        %v881 = vld [vmem:[#allocation10 + $0x40] sm:$0xff]
        %v882 = vld [vmem:[#allocation10 + $0x48] sm:$0xff]
        %v883 = vld [vmem:[#allocation10 + $0x50] sm:$0xff]
        %v884 = vld [vmem:[#allocation10 + $0x58] sm:$0xff]
        %v885 = vld [vmem:[#allocation10 + $0x60] sm:$0xff]
        %v886 = vld [vmem:[#allocation10 + $0x68] sm:$0xff]
        %v887 = vld [vmem:[#allocation10 + $0x70] sm:$0xff]
        %v888 = vld [vmem:[#allocation10 + $0x78] sm:$0xff]
        %v889 = vld [vmem:[%s8] sm:$0x1]
        %v891 = vlaneseq
        %v892 = vshrl.u32 %v891, 7
        %v893 = vsub.s32 0, %v892
        %v894 = vrot.slane %v889, %v893
        %896 = vmatprep.subr.mxu0 0.0
        %897 = vmatpush1.msra.mxu0 %v873
        %898 = vmatprep.subr.mxu0 0.0
        %899 = vmatpush1.msra.mxu0 %v874
        %900 = vmatprep.subr.mxu0 0.0
        %901 = vmatpush1.msra.mxu0 %v875
        %902 = vmatprep.subr.mxu0 0.0
        %903 = vmatpush1.msra.mxu0 %v876
        %904 = vmatprep.subr.mxu0 0.0
        %905 = vmatpush1.msra.mxu0 %v877
        %906 = vmatprep.subr.mxu0 0.0
        %907 = vmatpush1.msra.mxu0 %v878
        %908 = vmatprep.subr.mxu0 0.0
        %909 = vmatpush1.msra.mxu0 %v879
        %910 = vmatprep.subr.mxu0 0.0
        %911 = vmatpush1.msra.mxu0 %v880
        %912 = vmatprep.subr.mxu0 0.0
        %913 = vmatpush1.msra.mxu0 %v881
        %914 = vmatprep.subr.mxu0 0.0
        %915 = vmatpush1.msra.mxu0 %v882
        %916 = vmatprep.subr.mxu0 0.0
        %917 = vmatpush1.msra.mxu0 %v883
        %918 = vmatprep.subr.mxu0 0.0
        %919 = vmatpush1.msra.mxu0 %v884
        %920 = vmatprep.subr.mxu0 0.0
        %921 = vmatpush1.msra.mxu0 %v885
        %922 = vmatprep.subr.mxu0 0.0
        %923 = vmatpush1.msra.mxu0 %v886
        %924 = vmatprep.subr.mxu0 0.0
        %925 = vmatpush1.msra.mxu0 %v887
        %926 = vmatprep.subr.mxu0 0.0
        %927 = vmatpush1.msra.mxu0 %v888
        %928 = vmatprep.subr.mxu0 0.0
        %929 = vmatpush1.msra.mxu0 0.0
        %930 = vmatprep.subr.mxu0 0.0
        %931 = vmatpush1.msra.mxu0 0.0
        %932 = vmatprep.subr.mxu0 0.0
        %933 = vmatpush1.msra.mxu0 0.0
        %934 = vmatprep.subr.mxu0 0.0
        %935 = vmatpush1.msra.mxu0 0.0
        %936 = vmatprep.subr.mxu0 0.0
        %937 = vmatpush1.msra.mxu0 0.0
        %938 = vmatprep.subr.mxu0 0.0
        %939 = vmatpush1.msra.mxu0 0.0
        %940 = vmatprep.subr.mxu0 0.0
        %941 = vmatpush1.msra.mxu0 0.0
        %942 = vmatprep.subr.mxu0 0.0
        %943 = vmatpush1.msra.mxu0 0.0
        %944 = vmatprep.subr.mxu0 0.0
        %945 = vmatpush1.msra.mxu0 0.0
        %946 = vmatprep.subr.mxu0 0.0
        %947 = vmatpush1.msra.mxu0 0.0
        %948 = vmatprep.subr.mxu0 0.0
        %949 = vmatpush1.msra.mxu0 0.0
        %950 = vmatprep.subr.mxu0 0.0
        %951 = vmatpush1.msra.mxu0 0.0
        %952 = vmatprep.subr.mxu0 0.0
        %953 = vmatpush1.msra.mxu0 0.0
        %954 = vmatprep.subr.mxu0 0.0
        %955 = vmatpush1.msra.mxu0 0.0
        %956 = vmatprep.subr.mxu0 0.0
        %957 = vmatpush1.msra.mxu0 0.0
        %958 = vmatprep.subr.mxu0 0.0
        %959 = vmatpush1.msra.mxu0 0.0
        %960 = vmatprep.mubr.f32.mxu0 0.0
        %961 = vmatmul.mubr.f32.gmra.mrb[0].mxu0 %v872
        %v962 = vpop.f32.mrb[0].mxu0
        %v963 = vadd.f32 %v894, %v962
        %v964 = vpop.f32.mrb[0].mxu0
        %965 = vdwg.mxu0
        %v966 = vmul.f32 %v963, %v963
        %v967 = vsel %vm685, %v966, 0.0
        %968 = vadd.xlane.f32.xlu0 %v967
        %v969 = vpop.xlane.xlu0 %968
        %v970 = vmax.f32 %v969, 1e-24
        %v971 = vrsqrt.pop %v970
        %v972 = vmul.f32 %v963, %v971
        %v973 = vrot.slane %v406, 2
        %v975 = vmul.f32 %v972, %v973
        %vm976 = vcmask 1045504
        %v977 = vsel %vm976, %v975, 0.0
        %978 = vadd.xlane.f32.xlu0 %v977
        %v979 = vpop.xlane.xlu0 %978
        %v980 = vrot.slane %v979, 4
        %v981 = vadd.f32 %v979, %v980
        %v982 = vrot.slane %v981, 2
        %v983 = vadd.f32 %v981, %v982
        %v984 = vrot.slane %v983, 1
        %v985 = vadd.f32 %v983, %v984
        %s986 = vtos %v985
        %s987 = smul.f32 %s986, 2.0
        %v988 = vrcp.pop 6.0
        %s989 = vtos %v988
        %s990 = smul.f32 %s987, %s989
        %s991 = ssub.f32 2.0, %s990
        %v992 = vstv %s991
        %993 = vst [vmem:[%s405] sm:$0xff] %v992
        %s994 = sand.u32 %s230, 1
        %s995 = scalar_lea.sflag [#allocation4], %s994
        %s996 = sand.u32 %s230, 1
        %s997 = smul.addr %s996, 8
        %s998 = scalar_lea.vmem [#allocation11], %s997
        // Predicated region
        $region77: #{tpu_custom_call.1} parent=55 // pred_check
          %p999 = pneg %p240
        $region78: #{tpu_custom_call.1} parent=55 // pred_check_branch
          %1001 = sbr.rel (%p999) target = $region80
        $region79: #{tpu_custom_call.1} parent=55 // pred_region
          %s1003 = ssub.s32 128, 128
          %1004 = vsyncadd %s995, %s1003
          %s1005 = smul.addr %s28, 128
          %s1006 = scalar_lea.hbm %s9, %s1005
          %s1008 = sshll.u32 %s998, 4
          %s1009 = int_to_ptr.vmem [resolvable:$true] %s1008
          %1011 = dma.vmem_to_hbm [thread:$0]  %s1009, 128, %s1006, %s995
        $region80: #{tpu_custom_call.1} parent=55 // pred_fallthru
          _
      $region56: #{tpu_custom_call.1} parent=5 // pred_fallthru
        _
      %p1012 = scmp.le.s32.totalorder 2, %s23
      // Predicated region
      $region81: #{tpu_custom_call.1} parent=5 // pred_check
        %p1013 = pneg %p1012
      $region82: #{tpu_custom_call.1} parent=5 // pred_check_branch
        %1015 = sbr.rel (%p1013) target = $region84
      $region83: #{tpu_custom_call.1} parent=5 // pred_region
        %s1016 = ssub.s32 %s23, 2
        // Predicated region
        $region85: #{tpu_custom_call.1} parent=83 // pred_check
          %p1017 = pneg %p246
        $region86: #{tpu_custom_call.1} parent=83 // pred_check_branch
          %1019 = sbr.rel (%p1017) target = $region88
        $region87: #{tpu_custom_call.1} parent=83 // pred_region
          %s1020 = sand.u32 %s231, 1
          %s1021 = scalar_lea.sflag [#allocation4], %s1020
          %s1022 = sand.u32 %s231, 1
          %s1023 = smul.addr %s1022, 8
          %s1024 = scalar_lea.vmem [#allocation11], %s1023
          %1025 = dma.done %s1021, 128
        $region88: #{tpu_custom_call.1} parent=83 // pred_fallthru
          _
      $region84: #{tpu_custom_call.1} parent=5 // pred_fallthru
        _
    $region6: #{tpu_custom_call.1} parent=1 // loop_footer
      %s27 = sadd.s32 1, %s23
    $region7: #{tpu_custom_call.1} parent=1 // loop_footer_branch
      %22 = sbr.rel target = $region3
    $region8: #{tpu_custom_call.1} parent=1 // loop_exit
      _
    %1026 = vsyncpa [#allocation3], 1
    %s1027 = scalar_lea.sflag [#allocation3], 1
    %1028 = vsyncpa %s1027, 1
    %1029 = vsyncpa [#allocation6], 1
    %1030 = vsyncpa [#allocation9], 1
    %1031 = vsyncpa [#allocation4], 1
    %s1032 = scalar_lea.sflag [#allocation4], 1
    %1033 = vsyncpa %s1032, 1

</llo_original>
